<compile_context>
chip_gen: v7x
topology: tpu7x:2x2x1
jax: 0.10.0
libtpu: 0.0.40
codegen_flags: <defaults>
</compile_context>

<pallas_src>
import functools

import jax
import jax.numpy as jnp
from jax.experimental import pallas as pl
from jax.experimental.pallas import tpu as pltpu

HIDDEN = 128
LANE = 128
SUBLANE = 8


def _round_up(x, m):
    return ((x + m - 1) // m) * m


def _mlp_kernel(x_ref, w1t_ref, b1_ref, w2_ref, b2_ref, o_ref):
    # x_ref  : (tm, F)       f32   batch tile, natural layout
    # w1t_ref: (F, HIDDEN)   f32   fc1 weight transposed to (in, out)
    # b1_ref : (1, HIDDEN)   f32
    # w2_ref : (1, HIDDEN)   f32   fc2 weight row
    # b2_ref : (1,)          f32   scalar in SMEM
    # o_ref  : (tm, 1)       f32
    h = jnp.dot(x_ref[...], w1t_ref[...],
                preferred_element_type=jnp.float32)          # MXU: (tm, HIDDEN)
    h = jnp.maximum(h + b1_ref[...], 0.0)                    # bias + ReLU (VPU)
    # fc2: elementwise scale (VPU) + lane reduce (XLU) -> (tm, 1)
    o = jnp.sum(h * w2_ref[...], axis=-1, keepdims=True) + b2_ref[0]
    o_ref[...] = o.astype(o_ref.dtype)


@functools.partial(jax.jit, static_argnames=("block_b",))
def anomaly_detection_forward(x, w1, b1, w2, b2, *, block_b=512):
    """Forward pass of AnomalyDetectionModel.

    x : (B, F) float32
    w1: (128, F)  -- PyTorch nn.Linear(F, 128).weight layout (out, in)
    b1: (128,)
    w2: (1, 128)  -- PyTorch nn.Linear(128, 1).weight layout
    b2: (1,)
    returns: (B, 1) float32
    """
    B, F = x.shape
    assert w1.shape == (HIDDEN, F)
    assert w2.shape == (1, HIDDEN)

    f32 = jnp.float32
    itemsize = 4

    # --- batch tile: big, but double-buffered x tiles stay inside a
    # conservative scoped-VMEM budget (v5e default ~16 MiB). ---------------
    F_r = _round_up(F, LANE)                       # physical lane footprint
    vmem_budget = 8 * 1024 * 1024
    cap = max(LANE, (vmem_budget // (2 * F_r * itemsize)) // LANE * LANE)
    tm = min(block_b, cap)
    tm = max(SUBLANE, (tm // SUBLANE) * SUBLANE)
    if B <= tm:
        tm = _round_up(B, SUBLANE)
    grid = (pl.cdiv(B, tm),)

    # --- parameter layout plumbing (tiny vs. x; x itself is untouched) -----
    xf = x.astype(f32)
    w1t = w1.astype(f32).T                         # (F, HIDDEN): fc1 as x @ W1^T
    b1r = b1.reshape(1, HIDDEN).astype(f32)
    w2r = w2.reshape(1, HIDDEN).astype(f32)
    b2s = b2.reshape(1).astype(f32)

    cost = pl.CostEstimate(
        flops=2 * B * F * HIDDEN + 4 * B * HIDDEN,
        transcendentals=0,
        bytes_accessed=(B * F * itemsize            # x (read once)
                        + F * HIDDEN * itemsize     # W1^T
                        + 2 * HIDDEN * itemsize     # b1, w2
                        + itemsize                  # b2
                        + B * itemsize),            # output
    )

    return pl.pallas_call(
        _mlp_kernel,
        out_shape=jax.ShapeDtypeStruct((B, 1), f32),
        grid_spec=pltpu.PrefetchScalarGridSpec(
            num_scalar_prefetch=0,
            grid=grid,
            in_specs=[
                pl.BlockSpec((tm, F), lambda i: (i, 0)),            # x tile
                pl.BlockSpec((F, HIDDEN), lambda i: (0, 0)),        # W1^T resident
                pl.BlockSpec((1, HIDDEN), lambda i: (0, 0)),        # b1 row
                pl.BlockSpec((1, HIDDEN), lambda i: (0, 0)),        # w2 row
                pl.BlockSpec(memory_space=pltpu.MemorySpace.SMEM),  # b2 scalar
            ],
            out_specs=pl.BlockSpec((tm, 1), lambda i: (i, 0)),
        ),
        compiler_params=pltpu.CompilerParams(
            dimension_semantics=("parallel",),     # shard batch across TCs
        ),
        cost_estimate=cost,
    )(xf, w1t, b1r, w2r, b2s)


def _reference(x, w1, b1, w2, b2):
    # Same math as the PyTorch module (Linear: y = x @ W^T + b).
    h = jnp.maximum(x @ w1.T + b1, 0.0)
    return h @ w2.T + b2


if __name__ == "__main__":
    key = jax.random.PRNGKey(0)

    # Small demo shape consistent with the module: batch=16, num_features=32.
    B, F = 16, 32
    kx, kw1, kb1, kw2, kb2 = jax.random.split(key, 5)
    x = jax.random.normal(kx, (B, F), dtype=jnp.float32)
    # Parameters in PyTorch nn.Linear layout: weight (out, in), bias (out,).
    w1 = jax.random.normal(kw1, (HIDDEN, F), dtype=jnp.float32) * 0.05
    b1 = jax.random.normal(kb1, (HIDDEN,), dtype=jnp.float32) * 0.01
    w2 = jax.random.normal(kw2, (1, HIDDEN), dtype=jnp.float32) * 0.05
    b2 = jax.random.normal(kb2, (1,), dtype=jnp.float32) * 0.01

    out = jax.block_until_ready(anomaly_detection_forward(x, w1, b1, w2, b2))
    ref = _reference(x, w1, b1, w2, b2)
    assert out.shape == (B, 1)
    # Tolerance accounts for TPU DEFAULT matmul precision (bf16 operands,
    # f32 accumulation).
    assert jnp.allclose(out, ref, atol=5e-3, rtol=5e-3), \
        float(jnp.max(jnp.abs(out - ref)))

    # Ragged shape: F not a multiple of 128, B not a multiple of the tile ->
    # exercises full-extent feature blocks, a multi-step batch grid, and
    # clipped writeback of the last (partially out-of-bounds) tile.
    B2, F2 = 300, 96
    kx2, kw12, kb12, kw22, kb22 = jax.random.split(jax.random.PRNGKey(1), 5)
    x2 = jax.random.normal(kx2, (B2, F2), dtype=jnp.float32)
    w12 = jax.random.normal(kw12, (HIDDEN, F2), dtype=jnp.float32) * 0.05
    b12 = jax.random.normal(kb12, (HIDDEN,), dtype=jnp.float32) * 0.01
    w22 = jax.random.normal(kw22, (1, HIDDEN), dtype=jnp.float32) * 0.05
    b22 = jax.random.normal(kb22, (1,), dtype=jnp.float32) * 0.01

    out2 = jax.block_until_ready(
        anomaly_detection_forward(x2, w12, b12, w22, b22, block_b=128))
    ref2 = _reference(x2, w12, b12, w22, b22)
    assert out2.shape == (B2, 1)
    assert jnp.allclose(out2, ref2, atol=5e-3, rtol=5e-3), \
        float(jnp.max(jnp.abs(out2 - ref2)))

    print("KERNEL_OK")
</pallas_src>

<mosaic_0001>
module attributes {stable_mosaic.version = 11 : i64} {
  func.func @_mlp_kernel(%arg0: i32, %arg1: memref<16x32xf32, #tpu.memory_space<vmem>>, %arg2: memref<32x128xf32, #tpu.memory_space<vmem>>, %arg3: memref<1x128xf32, #tpu.memory_space<vmem>>, %arg4: memref<1x128xf32, #tpu.memory_space<vmem>>, %arg5: memref<1xf32, #tpu.memory_space<smem>>, %arg6: memref<16x1xf32, #tpu.memory_space<vmem>>) attributes {dimension_semantics = [#tpu.dimension_semantics<parallel>], iteration_bounds = array<i64: 1>, scalar_prefetch = 0 : i64, scratch_operands = 0 : i64, tpu.core_type = #tpu.core_type<tc>, window_params = [{transform_indices = @transform_0, window_bounds = array<i64: 16, 32>}, {pipeline_mode = #tpu.pipeline_mode<synchronous>, transform_indices = @transform_1, window_bounds = array<i64: 32, 128>}, {pipeline_mode = #tpu.pipeline_mode<synchronous>, transform_indices = @transform_2, window_bounds = array<i64: 1, 128>}, {pipeline_mode = #tpu.pipeline_mode<synchronous>, transform_indices = @transform_3, window_bounds = array<i64: 1, 128>}, {transform_indices = @transform_4, window_bounds = array<i64: 1>}, {transform_indices = @transform_5, window_bounds = array<i64: 16, 1>}]} {
    %c0 = arith.constant 0 : index
    %c0_0 = arith.constant 0 : index
    %0 = vector.load %arg1[%c0, %c0_0] : memref<16x32xf32, #tpu.memory_space<vmem>>, vector<16x32xf32>
    %c0_1 = arith.constant 0 : index
    %c0_2 = arith.constant 0 : index
    %1 = vector.load %arg2[%c0_1, %c0_2] : memref<32x128xf32, #tpu.memory_space<vmem>>, vector<32x128xf32>
    %cst = arith.constant dense<0.000000e+00> : vector<16x128xf32>
    %2 = tpu.matmul %0, %1, %cst {dimension_numbers = #tpu.dot_dimension_numbers<[1], [0], [0], [1], [0, 0, 1, 1], [], []>} : vector<16x32xf32>, vector<32x128xf32>, vector<16x128xf32> -> vector<16x128xf32>
    %c0_3 = arith.constant 0 : index
    %c0_4 = arith.constant 0 : index
    %3 = vector.load %arg3[%c0_3, %c0_4] : memref<1x128xf32, #tpu.memory_space<vmem>>, vector<1x128xf32>
    %4 = vector.broadcast %3 : vector<1x128xf32> to vector<16x128xf32>
    %5 = arith.addf %2, %4 : vector<16x128xf32>
    %cst_5 = arith.constant 0.000000e+00 : f32
    %6 = vector.broadcast %cst_5 : f32 to vector<16x128xf32>
    %7 = arith.maximumf %5, %6 : vector<16x128xf32>
    %c0_6 = arith.constant 0 : index
    %c0_7 = arith.constant 0 : index
    %8 = vector.load %arg4[%c0_6, %c0_7] : memref<1x128xf32, #tpu.memory_space<vmem>>, vector<1x128xf32>
    %9 = vector.broadcast %8 : vector<1x128xf32> to vector<16x128xf32>
    %10 = arith.mulf %7, %9 : vector<16x128xf32>
    %cst_8 = arith.constant dense<0.000000e+00> : vector<16xf32>
    %11 = vector.multi_reduction <add>, %10, %cst_8 [1] : vector<16x128xf32> to vector<16xf32>
    %12 = vector.shape_cast %11 : vector<16xf32> to vector<16x1xf32>
    %c0_9 = arith.constant 0 : index
    %13 = memref.load %arg5[%c0_9] : memref<1xf32, #tpu.memory_space<smem>>
    %14 = vector.broadcast %13 : f32 to vector<16x1xf32>
    %15 = arith.addf %12, %14 : vector<16x1xf32>
    %c0_10 = arith.constant 0 : index
    %c0_11 = arith.constant 0 : index
    %16 = vector.load %arg6[%c0_10, %c0_11] : memref<16x1xf32, #tpu.memory_space<vmem>>, vector<16x1xf32>
    tpu.vector_store %arg6[%c0_10, %c0_11], %15 {strides = array<i32>} : memref<16x1xf32, #tpu.memory_space<vmem>>, vector<16x1xf32>,
    return
  }
  func.func @transform_0(%arg0: i32) -> (i32, i32) {
    %c0_i32 = arith.constant 0 : i32
    %c0_i32_0 = arith.constant 0 : i32
    return %arg0, %c0_i32 : i32, i32
  }
  func.func @transform_1(%arg0: i32) -> (i32, i32) {
    %c0_i32 = arith.constant 0 : i32
    %c0_i32_0 = arith.constant 0 : i32
    %c0_i32_1 = arith.constant 0 : i32
    return %c0_i32, %c0_i32_0 : i32, i32
  }
  func.func @transform_2(%arg0: i32) -> (i32, i32) {
    %c0_i32 = arith.constant 0 : i32
    %c0_i32_0 = arith.constant 0 : i32
    %c0_i32_1 = arith.constant 0 : i32
    return %c0_i32, %c0_i32_0 : i32, i32
  }
  func.func @transform_3(%arg0: i32) -> (i32, i32) {
    %c0_i32 = arith.constant 0 : i32
    %c0_i32_0 = arith.constant 0 : i32
    %c0_i32_1 = arith.constant 0 : i32
    return %c0_i32, %c0_i32_0 : i32, i32
  }
  func.func @transform_4(%arg0: i32) -> i32 {
    %c0_i32 = arith.constant 0 : i32
    %c0_i32_0 = arith.constant 0 : i32
    return %c0_i32 : i32
  }
  func.func @transform_5(%arg0: i32) -> (i32, i32) {
    %c0_i32 = arith.constant 0 : i32
    %c0_i32_0 = arith.constant 0 : i32
    return %arg0, %c0_i32 : i32, i32
  }
}

</mosaic_0001>

<llo_original>
// kernel: anomaly_detection_forward.1
$region0: #{anomaly_detection_forward.1}
  #allocation0 [shape = 'u32[]', space=smem, size = 0x4, offset = 0x4, fixed_abs, tag = 'smem constant byte address 0x4 - core index']
  #allocation1 [shape = 'u32[144,128]{1,0:T(1,128)}', space=vmem, size = 0x12000, scoped, tag = 'internal scratch']
  #allocation2 [shape = 'f32[1]{0:T(128)S(6)}', space=smem, size = 0x200, scoped, tag = 'scoped memory for anomaly_detection_forward.1']
  %s0 = inlined_call_operand.hbm [shape: f32[16,32], index: 0, kind: input, shape index: {}]
  %s1 = inlined_call_operand.hbm [shape: f32[32,128], index: 1, kind: input, shape index: {}]
  %s2 = inlined_call_operand.vmem [shape: f32[1,128], index: 2, kind: input, shape index: {}]
  %s3 = inlined_call_operand.vmem [shape: f32[1,128], index: 3, kind: input, shape index: {}]
  %s4 = inlined_call_operand.<no memory space> [shape: f32[1], index: 4, kind: input, shape index: {}]
  %s5 = inlined_call_operand.vmem [shape: f32[16,1], index: 5, kind: output, shape index: {}]
  %s6 = sld [smem:[#allocation0]]
  $region38: #{anomaly_detection_forward.1} parent=0
    _
  %s8 = ssub.s32 1, %s6
  %s9 = scalar_select 0, %s8, %s6
  %10 = sst [smem:[#allocation2]] %s4
  $region1: #{anomaly_detection_forward.1} parent=0
    #allocation3 [shape = 'u8[8192]{0}', space=vmem, size = 0x2000, scoped, tag = 'input window, operand 0, single buffered']
    #allocation4 [shape = 's32[1]{0}', space=sflag, size = 0x4, scoped, tag = 'scoped memory for anomaly_detection_forward.1']
    #allocation5 [shape = 'u8[16384]{0}', space=vmem, size = 0x4000, scoped, tag = 'input window, operand 1, single buffered']
    #allocation6 [shape = 's32[1]{0}', space=sflag, size = 0x4, scoped, tag = 'scoped memory for anomaly_detection_forward.1']
    %11 = vsyncpa [#allocation4], 0
    %12 = vsyncpa [#allocation6], 0
    // Predicated region
    $region2: #{anomaly_detection_forward.1} parent=1 // pred_check
      _
    $region3: #{anomaly_detection_forward.1} parent=1 // pred_check_branch
      %14 = sbr.rel (0) target = $region5
    $region4: #{anomaly_detection_forward.1} parent=1 // pred_region
      %s16 = ssub.s32 256, 256
      %17 = vsyncadd [#allocation4], %s16
      %s18 = sshll.u32 [#allocation3], 4
      %s19 = int_to_ptr.vmem [resolvable:$true] %s18
      %24 = dma.hbm_to_vmem [thread:$0]  %s0, 256, %s19, [#allocation4], 128, 128, 8
    $region5: #{anomaly_detection_forward.1} parent=1 // pred_fallthru
      _
    // Predicated region
    $region6: #{anomaly_detection_forward.1} parent=1 // pred_check
      _
    $region7: #{anomaly_detection_forward.1} parent=1 // pred_check_branch
      %26 = sbr.rel (0) target = $region9
    $region8: #{anomaly_detection_forward.1} parent=1 // pred_region
      %s28 = ssub.s32 512, 512
      %29 = vsyncadd [#allocation6], %s28
      %s30 = sshll.u32 [#allocation5], 4
      %s31 = int_to_ptr.vmem [resolvable:$true] %s30
      %36 = dma.hbm_to_vmem [thread:$0]  %s1, 512, %s31, [#allocation6], 128, 128, 8
    $region9: #{anomaly_detection_forward.1} parent=1 // pred_fallthru
      _
    // Predicated region
    $region10: #{anomaly_detection_forward.1} parent=1 // pred_check
      _
    $region11: #{anomaly_detection_forward.1} parent=1 // pred_check_branch
      %38 = sbr.rel (0) target = $region13
    $region12: #{anomaly_detection_forward.1} parent=1 // pred_region
      _
    $region13: #{anomaly_detection_forward.1} parent=1 // pred_fallthru
      _
    // Predicated region
    $region14: #{anomaly_detection_forward.1} parent=1 // pred_check
      _
    $region15: #{anomaly_detection_forward.1} parent=1 // pred_check_branch
      %40 = sbr.rel (0) target = $region17
    $region16: #{anomaly_detection_forward.1} parent=1 // pred_region
      _
    $region17: #{anomaly_detection_forward.1} parent=1 // pred_fallthru
      _
    // Predicated region
    $region18: #{anomaly_detection_forward.1} parent=1 // pred_check
      _
    $region19: #{anomaly_detection_forward.1} parent=1 // pred_check_branch
      %42 = sbr.rel (0) target = $region21
    $region20: #{anomaly_detection_forward.1} parent=1 // pred_region
      _
    $region21: #{anomaly_detection_forward.1} parent=1 // pred_fallthru
      _
    // Predicated region
    $region22: #{anomaly_detection_forward.1} parent=1 // pred_check
      _
    $region23: #{anomaly_detection_forward.1} parent=1 // pred_check_branch
      %44 = sbr.rel (0) target = $region25
    $region24: #{anomaly_detection_forward.1} parent=1 // pred_region
      %45 = dma.done [#allocation4], 256
    $region25: #{anomaly_detection_forward.1} parent=1 // pred_fallthru
      _
    // Predicated region
    $region26: #{anomaly_detection_forward.1} parent=1 // pred_check
      _
    $region27: #{anomaly_detection_forward.1} parent=1 // pred_check_branch
      %47 = sbr.rel (0) target = $region29
    $region28: #{anomaly_detection_forward.1} parent=1 // pred_region
      %48 = dma.done [#allocation6], 512
    $region29: #{anomaly_detection_forward.1} parent=1 // pred_fallthru
      _
    %v49 = vld [vmem:[#allocation3] sm:$0xff]
    %v50 = vld [vmem:[#allocation3 + $0x8] sm:$0xff]
    %v51 = vld [vmem:[#allocation5] sm:$0xff]
    %v52 = vld [vmem:[#allocation5 + $0x8] sm:$0xff]
    %v53 = vld [vmem:[#allocation5 + $0x10] sm:$0xff]
    %v54 = vld [vmem:[#allocation5 + $0x18] sm:$0xff]
    %v55 = vld [vmem:[%s2] sm:$0x1]
    %v57 = vlaneseq
    %v58 = vshrl.u32 %v57, 7
    %v59 = vsub.s32 0, %v58
    %v60 = vrot.slane %v55, %v59
    %vm62 = vcmask 261120
    %v64 = vsel %vm62, %v49, 0
    %v67 = vsel %vm62, %v50, 0
    %69 = vmatprep.subr.mxu0 0.0
    %70 = vmatpush1.msra.mxu0 %v51
    %71 = vmatprep.subr.mxu0 0.0
    %72 = vmatpush1.msra.mxu0 %v52
    %73 = vmatprep.subr.mxu0 0.0
    %74 = vmatpush1.msra.mxu0 %v53
    %75 = vmatprep.subr.mxu0 0.0
    %76 = vmatpush1.msra.mxu0 %v54
    %77 = vmatprep.subr.mxu0 0.0
    %78 = vmatpush1.msra.mxu0 0.0
    %79 = vmatprep.subr.mxu0 0.0
    %80 = vmatpush1.msra.mxu0 0.0
    %81 = vmatprep.subr.mxu0 0.0
    %82 = vmatpush1.msra.mxu0 0.0
    %83 = vmatprep.subr.mxu0 0.0
    %84 = vmatpush1.msra.mxu0 0.0
    %85 = vmatprep.subr.mxu0 0.0
    %86 = vmatpush1.msra.mxu0 0.0
    %87 = vmatprep.subr.mxu0 0.0
    %88 = vmatpush1.msra.mxu0 0.0
    %89 = vmatprep.subr.mxu0 0.0
    %90 = vmatpush1.msra.mxu0 0.0
    %91 = vmatprep.subr.mxu0 0.0
    %92 = vmatpush1.msra.mxu0 0.0
    %93 = vmatprep.subr.mxu0 0.0
    %94 = vmatpush1.msra.mxu0 0.0
    %95 = vmatprep.subr.mxu0 0.0
    %96 = vmatpush1.msra.mxu0 0.0
    %97 = vmatprep.subr.mxu0 0.0
    %98 = vmatpush1.msra.mxu0 0.0
    %99 = vmatprep.subr.mxu0 0.0
    %100 = vmatpush1.msra.mxu0 0.0
    %101 = vmatprep.subr.mxu0 0.0
    %102 = vmatpush1.msra.mxu0 0.0
    %103 = vmatprep.subr.mxu0 0.0
    %104 = vmatpush1.msra.mxu0 0.0
    %105 = vmatprep.subr.mxu0 0.0
    %106 = vmatpush1.msra.mxu0 0.0
    %107 = vmatprep.subr.mxu0 0.0
    %108 = vmatpush1.msra.mxu0 0.0
    %109 = vmatprep.subr.mxu0 0.0
    %110 = vmatpush1.msra.mxu0 0.0
    %111 = vmatprep.subr.mxu0 0.0
    %112 = vmatpush1.msra.mxu0 0.0
    %113 = vmatprep.subr.mxu0 0.0
    %114 = vmatpush1.msra.mxu0 0.0
    %115 = vmatprep.subr.mxu0 0.0
    %116 = vmatpush1.msra.mxu0 0.0
    %117 = vmatprep.subr.mxu0 0.0
    %118 = vmatpush1.msra.mxu0 0.0
    %119 = vmatprep.subr.mxu0 0.0
    %120 = vmatpush1.msra.mxu0 0.0
    %121 = vmatprep.subr.mxu0 0.0
    %122 = vmatpush1.msra.mxu0 0.0
    %123 = vmatprep.subr.mxu0 0.0
    %124 = vmatpush1.msra.mxu0 0.0
    %125 = vmatprep.subr.mxu0 0.0
    %126 = vmatpush1.msra.mxu0 0.0
    %127 = vmatprep.subr.mxu0 0.0
    %128 = vmatpush1.msra.mxu0 0.0
    %129 = vmatprep.subr.mxu0 0.0
    %130 = vmatpush1.msra.mxu0 0.0
    %131 = vmatprep.subr.mxu0 0.0
    %132 = vmatpush1.msra.mxu0 0.0
    %133 = vmatprep.mubr.f32.mxu0 0.0
    %134 = vmatmul.mubr.f32.gmra.mrb[0].mxu0 %v64
    %v135 = vpop.f32.mrb[0].mxu0
    %v136 = vadd.f32 %v60, %v135
    %v137 = vpop.f32.mrb[0].mxu0
    %138 = vmatprep.mubr.f32.mxu0 0.0
    %139 = vmatmul.mubr.f32.gmra.mrb[0].mxu0 %v67
    %v140 = vpop.f32.mrb[0].mxu0
    %v141 = vadd.f32 %v60, %v140
    %v142 = vpop.f32.mrb[0].mxu0
    %143 = vdwg.mxu0
    %v144 = vmax.f32 %v136, 0.0
    %v145 = vmax.f32 %v141, 0.0
    %v146 = vld [vmem:[%s3] sm:$0x1]
    %v148 = vlaneseq
    %v149 = vshrl.u32 %v148, 7
    %v150 = vsub.s32 0, %v149
    %v151 = vrot.slane %v146, %v150
    %v153 = vmul.f32 %v144, %v151
    %v154 = vmul.f32 %v145, %v151
    %155 = vadd.xlane.f32.xlu0 %v153
    %v156 = vpop.xlane.xlu0 %155
    %157 = vadd.xlane.f32.xlu0 %v154
    %v158 = vpop.xlane.xlu0 %157
    %s159 = sld [smem:[#allocation2]]
    %v160 = vstv %s159
    %v161 = vadd.f32 %v156, %v160
    %v162 = vadd.f32 %v158, %v160
    %vm163 = vcmask 7168
    %164 = vst.msk [vmem:[%s5] sm:$0xff] %vm163, %v161
    %165 = vst.msk [vmem:[%s5 + $0x8] sm:$0xff] %vm163, %v162
    // Predicated region
    $region30: #{anomaly_detection_forward.1} parent=1 // pred_check
      _
    $region31: #{anomaly_detection_forward.1} parent=1 // pred_check_branch
      %167 = sbr.rel (0) target = $region33
    $region32: #{anomaly_detection_forward.1} parent=1 // pred_region
      _
    $region33: #{anomaly_detection_forward.1} parent=1 // pred_fallthru
      _
    // Predicated region
    $region34: #{anomaly_detection_forward.1} parent=1 // pred_check
      _
    $region35: #{anomaly_detection_forward.1} parent=1 // pred_check_branch
      %169 = sbr.rel (0) target = $region37
    $region36: #{anomaly_detection_forward.1} parent=1 // pred_region
      _
    $region37: #{anomaly_detection_forward.1} parent=1 // pred_fallthru
      _
    %170 = vsyncpa [#allocation4], 1
    %171 = vsyncpa [#allocation6], 1

</llo_original>
